<compile_context>
chip_gen: v5e
topology: v5e:2x2
jax: 0.10.0
libtpu: 0.0.40
codegen_flags: <defaults>
</compile_context>

<pallas_src>
import functools

import jax
import jax.numpy as jnp
from jax.experimental import pallas as pl
from jax.experimental.pallas import tpu as pltpu


# ---------------------------------------------------------------------------
# Fused forward kernel: embed nets + fc (split-weight) + classifier + fc2
# ---------------------------------------------------------------------------
def _fused_forward_kernel(*refs, n_blocks):
    (drug_ref, cell_ref, np_ref,
     dw_ref, db_ref, cw_ref, cb_ref, nw_ref, nb_ref,
     fwd_ref, fwn_ref, fwc_ref, fb_ref) = refs[:13]
    idx = 13
    blk_refs = [(refs[idx + 2 * i], refs[idx + 2 * i + 1]) for i in range(n_blocks)]
    idx += 2 * n_blocks
    fc2w_ref, fc2b_ref, o_ref = refs[idx], refs[idx + 1], refs[idx + 2]

    def dense_relu(x, w_ref, b_ref):
        y = jnp.dot(x.astype(w_ref.dtype), w_ref[...],
                    preferred_element_type=jnp.float32)
        return jnp.maximum(y + b_ref[...], 0.0)

    # Embedding nets (Linear + ReLU each).
    drug_e = dense_relu(drug_ref[...], dw_ref, db_ref)
    cell_e = dense_relu(cell_ref[...], cw_ref, cb_ref)
    np_e = dense_relu(np_ref[...], nw_ref, nb_ref)

    # fc on cat([drug_e, np_e, cell_e], dim=1) == sum of three partial matmuls.
    h = jnp.dot(drug_e.astype(fwd_ref.dtype), fwd_ref[...],
                preferred_element_type=jnp.float32)
    h = h + jnp.dot(np_e.astype(fwn_ref.dtype), fwn_ref[...],
                    preferred_element_type=jnp.float32)
    h = h + jnp.dot(cell_e.astype(fwc_ref.dtype), fwc_ref[...],
                    preferred_element_type=jnp.float32)
    h = jnp.maximum(h + fb_ref[...], 0.0)

    # Classifier blocks: Linear (BN folded in) + ReLU; Dropout is identity in eval.
    for w_ref, b_ref in blk_refs:
        h = dense_relu(h, w_ref, b_ref)

    # fc2 (Dout = 1): VPU multiply + cross-lane reduce — no 1-wide MXU pass.
    out = jnp.sum(h * fc2w_ref[...], axis=-1, keepdims=True) + fc2b_ref[...]
    o_ref[...] = out.astype(o_ref.dtype)


# ---------------------------------------------------------------------------
# Wrapper: single pallas_call with a batch-parallel grid
# ---------------------------------------------------------------------------
def naive_model_np_forward(params, drug_x, cell_x, np_x, *, tile_b=None):
    B = drug_x.shape[0]
    if tile_b is None:
        # 256 = native MXU M on v6e/v7x; tiny demo batches run as one block.
        # NOTE(v7x): if tiles/feature dims grow, re-derive against 64 MiB VMEM.
        tile_b = B if B <= 256 else 256
    assert B % tile_b == 0, "batch must be divisible by the batch tile"

    weights = [
        params["drug_w"], params["drug_b"],
        params["cell_w"], params["cell_b"],
        params["np_w"], params["np_b"],
        params["fc_w_drug"], params["fc_w_np"], params["fc_w_cell"], params["fc_b"],
    ]
    for blk in params["cls"]:
        weights += [blk["w"], blk["b"]]
    weights += [params["fc2_w_row"], params["fc2_b"]]

    def batch_spec(arr):
        return pl.BlockSpec((tile_b, arr.shape[1]), lambda i: (i, 0))

    def resident_spec(arr):
        return pl.BlockSpec(arr.shape, lambda i: (0, 0))

    in_specs = ([batch_spec(drug_x), batch_spec(cell_x), batch_spec(np_x)]
                + [resident_spec(w) for w in weights])
    out_specs = pl.BlockSpec((tile_b, 1), lambda i: (i, 0))

    # Advisory cost hint for XLA's scheduler around the custom call.
    def nbytes(a):
        return a.size * a.dtype.itemsize

    flops = 2 * B * (
        params["drug_w"].shape[0] * params["drug_w"].shape[1]
        + params["cell_w"].shape[0] * params["cell_w"].shape[1]
        + params["np_w"].shape[0] * params["np_w"].shape[1]
        + (params["fc_w_drug"].shape[0] + params["fc_w_np"].shape[0]
           + params["fc_w_cell"].shape[0]) * params["fc_w_drug"].shape[1]
        + sum(b["w"].shape[0] * b["w"].shape[1] for b in params["cls"])
        + params["fc2_w_row"].shape[1]
    )
    bytes_accessed = (nbytes(drug_x) + nbytes(cell_x) + nbytes(np_x)
                      + sum(nbytes(w) for w in weights) + B * 4)
    cost = pl.CostEstimate(flops=flops, transcendentals=0,
                           bytes_accessed=bytes_accessed)

    kernel = functools.partial(_fused_forward_kernel, n_blocks=len(params["cls"]))
    return pl.pallas_call(
        kernel,
        out_shape=jax.ShapeDtypeStruct((B, 1), jnp.float32),
        grid=(B // tile_b,),
        in_specs=in_specs,
        out_specs=out_specs,
        compiler_params=pltpu.CompilerParams(dimension_semantics=("parallel",)),
        cost_estimate=cost,
    )(drug_x, cell_x, np_x, *weights)


# ---------------------------------------------------------------------------
# Deterministic parameter construction (synthetic — mirrors module __init__),
# with the wrapper-side folds the kernel relies on.
# ---------------------------------------------------------------------------
def _xavier_uniform(key, fan_in, fan_out):
    limit = jnp.sqrt(6.0 / (fan_in + fan_out))
    return jax.random.uniform(key, (fan_in, fan_out), jnp.float32, -limit, limit)


def make_params(key, drug_in, cell_in, np_in, drug_emb, cell_emb, np_emb,
                fc_hid_dim, weight_dtype=jnp.bfloat16):
    n_blocks = len(fc_hid_dim) - 1
    keys = jax.random.split(key, 5 + n_blocks)
    p = {}

    # Embed nets (synthetic: single Linear + ReLU each), stored (in, out).
    p["drug_w"] = _xavier_uniform(keys[0], drug_in, drug_emb).astype(weight_dtype)
    p["drug_b"] = jnp.zeros((1, drug_emb), jnp.float32)
    p["cell_w"] = _xavier_uniform(keys[1], cell_in, cell_emb).astype(weight_dtype)
    p["cell_b"] = jnp.zeros((1, cell_emb), jnp.float32)
    p["np_w"] = _xavier_uniform(keys[2], np_in, np_emb).astype(weight_dtype)
    p["np_b"] = jnp.zeros((1, np_emb), jnp.float32)

    # self.fc over cat([drug_e, np_e, cell_e]) — build once, split by group so
    # the kernel never needs a concatenation (torch.cat order: drug, np, cell).
    fc_in_dim = drug_emb + np_emb + cell_emb
    fc_w = _xavier_uniform(keys[3], fc_in_dim, fc_hid_dim[0])
    p["fc_w_drug"] = fc_w[:drug_emb].astype(weight_dtype)
    p["fc_w_np"] = fc_w[drug_emb:drug_emb + np_emb].astype(weight_dtype)
    p["fc_w_cell"] = fc_w[drug_emb + np_emb:].astype(weight_dtype)
    p["fc_b"] = jnp.zeros((1, fc_hid_dim[0]), jnp.float32)

    # Classifier blocks: Linear(xavier) + BatchNorm1d(default running stats,
    # eval) + ReLU + Dropout. BN eval affine is folded into the Linear.
    eps = 1e-5
    p["cls"] = []
    for i, (din, dout) in enumerate(zip(fc_hid_dim, fc_hid_dim[1:])):
        w = _xavier_uniform(keys[4 + i], din, dout)
        b = jnp.zeros((dout,), jnp.float32)
        gamma = jnp.ones((dout,), jnp.float32)
        beta = jnp.zeros((dout,), jnp.float32)
        running_mean = jnp.zeros((dout,), jnp.float32)
        running_var = jnp.ones((dout,), jnp.float32)
        scale = gamma / jnp.sqrt(running_var + eps)
        shift = beta - running_mean * scale
        p["cls"].append({
            "w": (w * scale[None, :]).astype(weight_dtype),   # W' = W * scale
            "b": (b * scale + shift).reshape(1, dout),        # b' = b*scale + shift
        })

    # self.fc2 — kept as an f32 (1, H) row for the in-kernel multiply+reduce.
    fc2_w = _xavier_uniform(keys[4 + n_blocks], fc_hid_dim[-1], 1)
    p["fc2_w_row"] = fc2_w.reshape(1, fc_hid_dim[-1])
    p["fc2_b"] = jnp.zeros((1, 1), jnp.float32)
    return p


if __name__ == "__main__":
    key = jax.random.PRNGKey(0)
    k_drug, k_cell, k_np, k_params = jax.random.split(key, 4)

    # Small, forward-consistent shapes.
    B = 4
    drug_in, cell_in, np_in = 64, 96, 64
    drug_emb, cell_emb, np_emb = 32, 64, 32
    fc_hid_dim = [128, 128]  # one classifier block (Linear+BN+ReLU+Dropout)

    drug_x = jax.random.normal(k_drug, (B, drug_in), jnp.float32)
    cell_x = jax.random.normal(k_cell, (B, cell_in), jnp.float32)
    np_x = jax.random.normal(k_np, (B, np_in), jnp.float32)

    params = make_params(k_params, drug_in, cell_in, np_in,
                         drug_emb, cell_emb, np_emb, fc_hid_dim)

    out = naive_model_np_forward(params, drug_x, cell_x, np_x)
    out = jax.block_until_ready(out)
    assert out.shape == (B, 1) and out.dtype == jnp.float32
    print("KERNEL_OK")
</pallas_src>

<mosaic_0001>
module attributes {stable_mosaic.version = 11 : i64} {
  func.func @_fused_forward_kernel(%arg0: i32, %arg1: memref<4x64xf32, #tpu.memory_space<vmem>>, %arg2: memref<4x96xf32, #tpu.memory_space<vmem>>, %arg3: memref<4x64xf32, #tpu.memory_space<vmem>>, %arg4: memref<64x32xbf16, #tpu.memory_space<vmem>>, %arg5: memref<1x32xf32, #tpu.memory_space<vmem>>, %arg6: memref<96x64xbf16, #tpu.memory_space<vmem>>, %arg7: memref<1x64xf32, #tpu.memory_space<vmem>>, %arg8: memref<64x32xbf16, #tpu.memory_space<vmem>>, %arg9: memref<1x32xf32, #tpu.memory_space<vmem>>, %arg10: memref<32x128xbf16, #tpu.memory_space<vmem>>, %arg11: memref<32x128xbf16, #tpu.memory_space<vmem>>, %arg12: memref<64x128xbf16, #tpu.memory_space<vmem>>, %arg13: memref<1x128xf32, #tpu.memory_space<vmem>>, %arg14: memref<128x128xbf16, #tpu.memory_space<vmem>>, %arg15: memref<1x128xf32, #tpu.memory_space<vmem>>, %arg16: memref<1x128xf32, #tpu.memory_space<vmem>>, %arg17: memref<1x1xf32, #tpu.memory_space<vmem>>, %arg18: memref<4x1xf32, #tpu.memory_space<vmem>>) attributes {dimension_semantics = [#tpu.dimension_semantics<parallel>], iteration_bounds = array<i64: 1>, scalar_prefetch = 0 : i64, scratch_operands = 0 : i64, tpu.core_type = #tpu.core_type<tc>, window_params = [{transform_indices = @transform_0, window_bounds = array<i64: 4, 64>}, {transform_indices = @transform_1, window_bounds = array<i64: 4, 96>}, {transform_indices = @transform_2, window_bounds = array<i64: 4, 64>}, {pipeline_mode = #tpu.pipeline_mode<synchronous>, transform_indices = @transform_3, window_bounds = array<i64: 64, 32>}, {pipeline_mode = #tpu.pipeline_mode<synchronous>, transform_indices = @transform_4, window_bounds = array<i64: 1, 32>}, {pipeline_mode = #tpu.pipeline_mode<synchronous>, transform_indices = @transform_5, window_bounds = array<i64: 96, 64>}, {pipeline_mode = #tpu.pipeline_mode<synchronous>, transform_indices = @transform_6, window_bounds = array<i64: 1, 64>}, {pipeline_mode = #tpu.pipeline_mode<synchronous>, transform_indices = @transform_7, window_bounds = array<i64: 64, 32>}, {pipeline_mode = #tpu.pipeline_mode<synchronous>, transform_indices = @transform_8, window_bounds = array<i64: 1, 32>}, {pipeline_mode = #tpu.pipeline_mode<synchronous>, transform_indices = @transform_9, window_bounds = array<i64: 32, 128>}, {pipeline_mode = #tpu.pipeline_mode<synchronous>, transform_indices = @transform_10, window_bounds = array<i64: 32, 128>}, {pipeline_mode = #tpu.pipeline_mode<synchronous>, transform_indices = @transform_11, window_bounds = array<i64: 64, 128>}, {pipeline_mode = #tpu.pipeline_mode<synchronous>, transform_indices = @transform_12, window_bounds = array<i64: 1, 128>}, {pipeline_mode = #tpu.pipeline_mode<synchronous>, transform_indices = @transform_13, window_bounds = array<i64: 128, 128>}, {pipeline_mode = #tpu.pipeline_mode<synchronous>, transform_indices = @transform_14, window_bounds = array<i64: 1, 128>}, {pipeline_mode = #tpu.pipeline_mode<synchronous>, transform_indices = @transform_15, window_bounds = array<i64: 1, 128>}, {pipeline_mode = #tpu.pipeline_mode<synchronous>, transform_indices = @transform_16, window_bounds = array<i64: 1, 1>}, {transform_indices = @transform_17, window_bounds = array<i64: 4, 1>}]} {
    %c0 = arith.constant 0 : index
    %c0_0 = arith.constant 0 : index
    %0 = vector.load %arg1[%c0, %c0_0] : memref<4x64xf32, #tpu.memory_space<vmem>>, vector<4x64xf32>
    %1 = arith.truncf %0 : vector<4x64xf32> to vector<4x64xbf16>
    %c0_1 = arith.constant 0 : index
    %c0_2 = arith.constant 0 : index
    %2 = vector.load %arg4[%c0_1, %c0_2] : memref<64x32xbf16, #tpu.memory_space<vmem>>, vector<64x32xbf16>
    %cst = arith.constant dense<0.000000e+00> : vector<4x32xf32>
    %3 = tpu.matmul %1, %2, %cst {dimension_numbers = #tpu.dot_dimension_numbers<[1], [0], [0], [1], [0, 0, 1, 1], [], []>} : vector<4x64xbf16>, vector<64x32xbf16>, vector<4x32xf32> -> vector<4x32xf32>
    %c0_3 = arith.constant 0 : index
    %c0_4 = arith.constant 0 : index
    %4 = vector.load %arg5[%c0_3, %c0_4] : memref<1x32xf32, #tpu.memory_space<vmem>>, vector<1x32xf32>
    %5 = vector.broadcast %4 : vector<1x32xf32> to vector<4x32xf32>
    %6 = arith.addf %3, %5 : vector<4x32xf32>
    %cst_5 = arith.constant 0.000000e+00 : f32
    %7 = vector.broadcast %cst_5 : f32 to vector<4x32xf32>
    %8 = arith.maximumf %6, %7 : vector<4x32xf32>
    %c0_6 = arith.constant 0 : index
    %c0_7 = arith.constant 0 : index
    %9 = vector.load %arg2[%c0_6, %c0_7] : memref<4x96xf32, #tpu.memory_space<vmem>>, vector<4x96xf32>
    %10 = arith.truncf %9 : vector<4x96xf32> to vector<4x96xbf16>
    %c0_8 = arith.constant 0 : index
    %c0_9 = arith.constant 0 : index
    %11 = vector.load %arg6[%c0_8, %c0_9] : memref<96x64xbf16, #tpu.memory_space<vmem>>, vector<96x64xbf16>
    %cst_10 = arith.constant dense<0.000000e+00> : vector<4x64xf32>
    %12 = tpu.matmul %10, %11, %cst_10 {dimension_numbers = #tpu.dot_dimension_numbers<[1], [0], [0], [1], [0, 0, 1, 1], [], []>} : vector<4x96xbf16>, vector<96x64xbf16>, vector<4x64xf32> -> vector<4x64xf32>
    %c0_11 = arith.constant 0 : index
    %c0_12 = arith.constant 0 : index
    %13 = vector.load %arg7[%c0_11, %c0_12] : memref<1x64xf32, #tpu.memory_space<vmem>>, vector<1x64xf32>
    %14 = vector.broadcast %13 : vector<1x64xf32> to vector<4x64xf32>
    %15 = arith.addf %12, %14 : vector<4x64xf32>
    %cst_13 = arith.constant 0.000000e+00 : f32
    %16 = vector.broadcast %cst_13 : f32 to vector<4x64xf32>
    %17 = arith.maximumf %15, %16 : vector<4x64xf32>
    %c0_14 = arith.constant 0 : index
    %c0_15 = arith.constant 0 : index
    %18 = vector.load %arg3[%c0_14, %c0_15] : memref<4x64xf32, #tpu.memory_space<vmem>>, vector<4x64xf32>
    %19 = arith.truncf %18 : vector<4x64xf32> to vector<4x64xbf16>
    %c0_16 = arith.constant 0 : index
    %c0_17 = arith.constant 0 : index
    %20 = vector.load %arg8[%c0_16, %c0_17] : memref<64x32xbf16, #tpu.memory_space<vmem>>, vector<64x32xbf16>
    %cst_18 = arith.constant dense<0.000000e+00> : vector<4x32xf32>
    %21 = tpu.matmul %19, %20, %cst_18 {dimension_numbers = #tpu.dot_dimension_numbers<[1], [0], [0], [1], [0, 0, 1, 1], [], []>} : vector<4x64xbf16>, vector<64x32xbf16>, vector<4x32xf32> -> vector<4x32xf32>
    %c0_19 = arith.constant 0 : index
    %c0_20 = arith.constant 0 : index
    %22 = vector.load %arg9[%c0_19, %c0_20] : memref<1x32xf32, #tpu.memory_space<vmem>>, vector<1x32xf32>
    %23 = vector.broadcast %22 : vector<1x32xf32> to vector<4x32xf32>
    %24 = arith.addf %21, %23 : vector<4x32xf32>
    %cst_21 = arith.constant 0.000000e+00 : f32
    %25 = vector.broadcast %cst_21 : f32 to vector<4x32xf32>
    %26 = arith.maximumf %24, %25 : vector<4x32xf32>
    %27 = arith.truncf %8 : vector<4x32xf32> to vector<4x32xbf16>
    %c0_22 = arith.constant 0 : index
    %c0_23 = arith.constant 0 : index
    %28 = vector.load %arg10[%c0_22, %c0_23] : memref<32x128xbf16, #tpu.memory_space<vmem>>, vector<32x128xbf16>
    %cst_24 = arith.constant dense<0.000000e+00> : vector<4x128xf32>
    %29 = tpu.matmul %27, %28, %cst_24 {dimension_numbers = #tpu.dot_dimension_numbers<[1], [0], [0], [1], [0, 0, 1, 1], [], []>} : vector<4x32xbf16>, vector<32x128xbf16>, vector<4x128xf32> -> vector<4x128xf32>
    %30 = arith.truncf %26 : vector<4x32xf32> to vector<4x32xbf16>
    %c0_25 = arith.constant 0 : index
    %c0_26 = arith.constant 0 : index
    %31 = vector.load %arg11[%c0_25, %c0_26] : memref<32x128xbf16, #tpu.memory_space<vmem>>, vector<32x128xbf16>
    %cst_27 = arith.constant dense<0.000000e+00> : vector<4x128xf32>
    %32 = tpu.matmul %30, %31, %cst_27 {dimension_numbers = #tpu.dot_dimension_numbers<[1], [0], [0], [1], [0, 0, 1, 1], [], []>} : vector<4x32xbf16>, vector<32x128xbf16>, vector<4x128xf32> -> vector<4x128xf32>
    %33 = arith.addf %29, %32 : vector<4x128xf32>
    %34 = arith.truncf %17 : vector<4x64xf32> to vector<4x64xbf16>
    %c0_28 = arith.constant 0 : index
    %c0_29 = arith.constant 0 : index
    %35 = vector.load %arg12[%c0_28, %c0_29] : memref<64x128xbf16, #tpu.memory_space<vmem>>, vector<64x128xbf16>
    %cst_30 = arith.constant dense<0.000000e+00> : vector<4x128xf32>
    %36 = tpu.matmul %34, %35, %cst_30 {dimension_numbers = #tpu.dot_dimension_numbers<[1], [0], [0], [1], [0, 0, 1, 1], [], []>} : vector<4x64xbf16>, vector<64x128xbf16>, vector<4x128xf32> -> vector<4x128xf32>
    %37 = arith.addf %33, %36 : vector<4x128xf32>
    %c0_31 = arith.constant 0 : index
    %c0_32 = arith.constant 0 : index
    %38 = vector.load %arg13[%c0_31, %c0_32] : memref<1x128xf32, #tpu.memory_space<vmem>>, vector<1x128xf32>
    %39 = vector.broadcast %38 : vector<1x128xf32> to vector<4x128xf32>
    %40 = arith.addf %37, %39 : vector<4x128xf32>
    %cst_33 = arith.constant 0.000000e+00 : f32
    %41 = vector.broadcast %cst_33 : f32 to vector<4x128xf32>
    %42 = arith.maximumf %40, %41 : vector<4x128xf32>
    %43 = arith.truncf %42 : vector<4x128xf32> to vector<4x128xbf16>
    %c0_34 = arith.constant 0 : index
    %c0_35 = arith.constant 0 : index
    %44 = vector.load %arg14[%c0_34, %c0_35] : memref<128x128xbf16, #tpu.memory_space<vmem>>, vector<128x128xbf16>
    %cst_36 = arith.constant dense<0.000000e+00> : vector<4x128xf32>
    %45 = tpu.matmul %43, %44, %cst_36 {dimension_numbers = #tpu.dot_dimension_numbers<[1], [0], [0], [1], [0, 0, 1, 1], [], []>} : vector<4x128xbf16>, vector<128x128xbf16>, vector<4x128xf32> -> vector<4x128xf32>
    %c0_37 = arith.constant 0 : index
    %c0_38 = arith.constant 0 : index
    %46 = vector.load %arg15[%c0_37, %c0_38] : memref<1x128xf32, #tpu.memory_space<vmem>>, vector<1x128xf32>
    %47 = vector.broadcast %46 : vector<1x128xf32> to vector<4x128xf32>
    %48 = arith.addf %45, %47 : vector<4x128xf32>
    %cst_39 = arith.constant 0.000000e+00 : f32
    %49 = vector.broadcast %cst_39 : f32 to vector<4x128xf32>
    %50 = arith.maximumf %48, %49 : vector<4x128xf32>
    %c0_40 = arith.constant 0 : index
    %c0_41 = arith.constant 0 : index
    %51 = vector.load %arg16[%c0_40, %c0_41] : memref<1x128xf32, #tpu.memory_space<vmem>>, vector<1x128xf32>
    %52 = vector.broadcast %51 : vector<1x128xf32> to vector<4x128xf32>
    %53 = arith.mulf %50, %52 : vector<4x128xf32>
    %cst_42 = arith.constant dense<0.000000e+00> : vector<4xf32>
    %54 = vector.multi_reduction <add>, %53, %cst_42 [1] : vector<4x128xf32> to vector<4xf32>
    %55 = vector.shape_cast %54 : vector<4xf32> to vector<4x1xf32>
    %c0_43 = arith.constant 0 : index
    %c0_44 = arith.constant 0 : index
    %56 = vector.load %arg17[%c0_43, %c0_44] : memref<1x1xf32, #tpu.memory_space<vmem>>, vector<1x1xf32>
    %57 = vector.broadcast %56 : vector<1x1xf32> to vector<4x1xf32>
    %58 = arith.addf %55, %57 : vector<4x1xf32>
    %c0_45 = arith.constant 0 : index
    %c0_46 = arith.constant 0 : index
    %59 = vector.load %arg18[%c0_45, %c0_46] : memref<4x1xf32, #tpu.memory_space<vmem>>, vector<4x1xf32>
    tpu.vector_store %arg18[%c0_45, %c0_46], %58 {strides = array<i32>} : memref<4x1xf32, #tpu.memory_space<vmem>>, vector<4x1xf32>,
    return
  }
  func.func @transform_0(%arg0: i32) -> (i32, i32) {
    %c0_i32 = arith.constant 0 : i32
    %c0_i32_0 = arith.constant 0 : i32
    return %arg0, %c0_i32 : i32, i32
  }
  func.func @transform_1(%arg0: i32) -> (i32, i32) {
    %c0_i32 = arith.constant 0 : i32
    %c0_i32_0 = arith.constant 0 : i32
    return %arg0, %c0_i32 : i32, i32
  }
  func.func @transform_2(%arg0: i32) -> (i32, i32) {
    %c0_i32 = arith.constant 0 : i32
    %c0_i32_0 = arith.constant 0 : i32
    return %arg0, %c0_i32 : i32, i32
  }
  func.func @transform_3(%arg0: i32) -> (i32, i32) {
    %c0_i32 = arith.constant 0 : i32
    %c0_i32_0 = arith.constant 0 : i32
    %c0_i32_1 = arith.constant 0 : i32
    return %c0_i32, %c0_i32_0 : i32, i32
  }
  func.func @transform_4(%arg0: i32) -> (i32, i32) {
    %c0_i32 = arith.constant 0 : i32
    %c0_i32_0 = arith.constant 0 : i32
    %c0_i32_1 = arith.constant 0 : i32
    return %c0_i32, %c0_i32_0 : i32, i32
  }
  func.func @transform_5(%arg0: i32) -> (i32, i32) {
    %c0_i32 = arith.constant 0 : i32
    %c0_i32_0 = arith.constant 0 : i32
    %c0_i32_1 = arith.constant 0 : i32
    return %c0_i32, %c0_i32_0 : i32, i32
  }
  func.func @transform_6(%arg0: i32) -> (i32, i32) {
    %c0_i32 = arith.constant 0 : i32
    %c0_i32_0 = arith.constant 0 : i32
    %c0_i32_1 = arith.constant 0 : i32
    return %c0_i32, %c0_i32_0 : i32, i32
  }
  func.func @transform_7(%arg0: i32) -> (i32, i32) {
    %c0_i32 = arith.constant 0 : i32
    %c0_i32_0 = arith.constant 0 : i32
    %c0_i32_1 = arith.constant 0 : i32
    return %c0_i32, %c0_i32_0 : i32, i32
  }
  func.func @transform_8(%arg0: i32) -> (i32, i32) {
    %c0_i32 = arith.constant 0 : i32
    %c0_i32_0 = arith.constant 0 : i32
    %c0_i32_1 = arith.constant 0 : i32
    return %c0_i32, %c0_i32_0 : i32, i32
  }
  func.func @transform_9(%arg0: i32) -> (i32, i32) {
    %c0_i32 = arith.constant 0 : i32
    %c0_i32_0 = arith.constant 0 : i32
    %c0_i32_1 = arith.constant 0 : i32
    return %c0_i32, %c0_i32_0 : i32, i32
  }
  func.func @transform_10(%arg0: i32) -> (i32, i32) {
    %c0_i32 = arith.constant 0 : i32
    %c0_i32_0 = arith.constant 0 : i32
    %c0_i32_1 = arith.constant 0 : i32
    return %c0_i32, %c0_i32_0 : i32, i32
  }
  func.func @transform_11(%arg0: i32) -> (i32, i32) {
    %c0_i32 = arith.constant 0 : i32
    %c0_i32_0 = arith.constant 0 : i32
    %c0_i32_1 = arith.constant 0 : i32
    return %c0_i32, %c0_i32_0 : i32, i32
  }
  func.func @transform_12(%arg0: i32) -> (i32, i32) {
    %c0_i32 = arith.constant 0 : i32
    %c0_i32_0 = arith.constant 0 : i32
    %c0_i32_1 = arith.constant 0 : i32
    return %c0_i32, %c0_i32_0 : i32, i32
  }
  func.func @transform_13(%arg0: i32) -> (i32, i32) {
    %c0_i32 = arith.constant 0 : i32
    %c0_i32_0 = arith.constant 0 : i32
    %c0_i32_1 = arith.constant 0 : i32
    return %c0_i32, %c0_i32_0 : i32, i32
  }
  func.func @transform_14(%arg0: i32) -> (i32, i32) {
    %c0_i32 = arith.constant 0 : i32
    %c0_i32_0 = arith.constant 0 : i32
    %c0_i32_1 = arith.constant 0 : i32
    return %c0_i32, %c0_i32_0 : i32, i32
  }
  func.func @transform_15(%arg0: i32) -> (i32, i32) {
    %c0_i32 = arith.constant 0 : i32
    %c0_i32_0 = arith.constant 0 : i32
    %c0_i32_1 = arith.constant 0 : i32
    return %c0_i32, %c0_i32_0 : i32, i32
  }
  func.func @transform_16(%arg0: i32) -> (i32, i32) {
    %c0_i32 = arith.constant 0 : i32
    %c0_i32_0 = arith.constant 0 : i32
    %c0_i32_1 = arith.constant 0 : i32
    return %c0_i32, %c0_i32_0 : i32, i32
  }
  func.func @transform_17(%arg0: i32) -> (i32, i32) {
    %c0_i32 = arith.constant 0 : i32
    %c0_i32_0 = arith.constant 0 : i32
    return %arg0, %c0_i32 : i32, i32
  }
}

</mosaic_0001>

<llo_original>
// kernel: tpu_custom_call.1
$region0: #{tpu_custom_call.1}
  #allocation0 [shape = 'u32[]', space=smem, size = 0x4, offset = 0x4, fixed_abs, tag = 'smem constant byte address 0x4 - core index']
  #allocation1 [shape = 'u32[72,128]{1,0:T(1,128)}', space=vmem, size = 0x9000, scoped, tag = 'internal scratch']
  #allocation2 [shape = 'f32[1,1]{1,0:T(1,128)S(1)}', space=vmem, size = 0x200, scoped, tag = 'scoped memory for tpu_custom_call.1']
  %s0 = inlined_call_operand.hbm [shape: f32[4,64], index: 0, kind: input, shape index: {}]
  %s1 = inlined_call_operand.hbm [shape: f32[4,96], index: 1, kind: input, shape index: {}]
  %s2 = inlined_call_operand.hbm [shape: f32[4,64], index: 2, kind: input, shape index: {}]
  %s3 = inlined_call_operand.vmem [shape: bf16[64,32], index: 3, kind: input, shape index: {}]
  %s4 = inlined_call_operand.vmem [shape: f32[1,32], index: 4, kind: input, shape index: {}]
  %s5 = inlined_call_operand.vmem [shape: bf16[96,64], index: 5, kind: input, shape index: {}]
  %s6 = inlined_call_operand.vmem [shape: f32[1,64], index: 6, kind: input, shape index: {}]
  %s7 = inlined_call_operand.vmem [shape: bf16[64,32], index: 7, kind: input, shape index: {}]
  %s8 = inlined_call_operand.vmem [shape: f32[1,32], index: 8, kind: input, shape index: {}]
  %s9 = inlined_call_operand.vmem [shape: bf16[32,128], index: 9, kind: input, shape index: {}]
  %s10 = inlined_call_operand.vmem [shape: bf16[32,128], index: 10, kind: input, shape index: {}]
  %s11 = inlined_call_operand.vmem [shape: bf16[64,128], index: 11, kind: input, shape index: {}]
  %s12 = inlined_call_operand.vmem [shape: f32[1,128], index: 12, kind: input, shape index: {}]
  %s13 = inlined_call_operand.vmem [shape: bf16[128,128], index: 13, kind: input, shape index: {}]
  %s14 = inlined_call_operand.vmem [shape: f32[1,128], index: 14, kind: input, shape index: {}]
  %s15 = inlined_call_operand.vmem [shape: f32[1,128], index: 15, kind: input, shape index: {}]
  %s16 = inlined_call_operand.<no memory space> [shape: f32[1,1], index: 16, kind: input, shape index: {}]
  %s17 = inlined_call_operand.vmem [shape: f32[4,1], index: 17, kind: output, shape index: {}]
  %s18 = sld [smem:[#allocation0]]
  $region90: #{tpu_custom_call.1} parent=0
    _
  %s20 = ssub.s32 1, %s18
  %s21 = scalar_select 0, %s20, %s18
  %v22 = vstv %s16
  %23 = vst [vmem:[#allocation2] sm:$0x1] %v22
  $region1: #{tpu_custom_call.1} parent=0
    #allocation3 [shape = 'u8[2048]{0}', space=vmem, size = 0x800, scoped, tag = 'input window, operand 0, single buffered']
    #allocation4 [shape = 's32[1]{0}', space=sflag, size = 0x4, scoped, tag = 'scoped memory for tpu_custom_call.1']
    #allocation5 [shape = 'u8[2048]{0}', space=vmem, size = 0x800, scoped, tag = 'input window, operand 1, single buffered']
    #allocation6 [shape = 's32[1]{0}', space=sflag, size = 0x4, scoped, tag = 'scoped memory for tpu_custom_call.1']
    #allocation7 [shape = 'u8[2048]{0}', space=vmem, size = 0x800, scoped, tag = 'input window, operand 2, single buffered']
    %24 = vsyncpa [#allocation4], 0
    %25 = vsyncpa [#allocation6], 0
    // Predicated region
    $region2: #{tpu_custom_call.1} parent=1 // pred_check
      _
    $region3: #{tpu_custom_call.1} parent=1 // pred_check_branch
      %27 = sbr.rel (0) target = $region5
    $region4: #{tpu_custom_call.1} parent=1 // pred_region
      %29 = vsyncadd [#allocation4], 0
      %s31 = sshll.u32 %s0, 4
      %s32 = int_to_ptr.hbm [resolvable:$true] %s31
      %s33 = sshll.u32 [#allocation3], 4
      %s34 = int_to_ptr.vmem [resolvable:$true] %s33
      %36 = dma.hbm_to_vmem [thread:$0]  %s32, 64, %s34, [#allocation4]
    $region5: #{tpu_custom_call.1} parent=1 // pred_fallthru
      _
    // Predicated region
    $region6: #{tpu_custom_call.1} parent=1 // pred_check
      _
    $region7: #{tpu_custom_call.1} parent=1 // pred_check_branch
      %38 = sbr.rel (0) target = $region9
    $region8: #{tpu_custom_call.1} parent=1 // pred_region
      %40 = vsyncadd [#allocation6], 0
      %s42 = sshll.u32 %s1, 4
      %s43 = int_to_ptr.hbm [resolvable:$true] %s42
      %s44 = sshll.u32 [#allocation5], 4
      %s45 = int_to_ptr.vmem [resolvable:$true] %s44
      %47 = dma.hbm_to_vmem [thread:$0]  %s43, 64, %s45, [#allocation6]
    $region9: #{tpu_custom_call.1} parent=1 // pred_fallthru
      _
    // Predicated region
    $region10: #{tpu_custom_call.1} parent=1 // pred_check
      _
    $region11: #{tpu_custom_call.1} parent=1 // pred_check_branch
      %49 = sbr.rel (0) target = $region13
    $region12: #{tpu_custom_call.1} parent=1 // pred_region
      %51 = vsyncadd [#allocation6], 0
      %s53 = sshll.u32 %s2, 4
      %s54 = int_to_ptr.hbm [resolvable:$true] %s53
      %s55 = sshll.u32 [#allocation7], 4
      %s56 = int_to_ptr.vmem [resolvable:$true] %s55
      %58 = dma.hbm_to_vmem [thread:$0]  %s54, 64, %s56, [#allocation6]
    $region13: #{tpu_custom_call.1} parent=1 // pred_fallthru
      _
    // Predicated region
    $region14: #{tpu_custom_call.1} parent=1 // pred_check
      _
    $region15: #{tpu_custom_call.1} parent=1 // pred_check_branch
      %60 = sbr.rel (0) target = $region17
    $region16: #{tpu_custom_call.1} parent=1 // pred_region
      _
    $region17: #{tpu_custom_call.1} parent=1 // pred_fallthru
      _
    // Predicated region
    $region18: #{tpu_custom_call.1} parent=1 // pred_check
      _
    $region19: #{tpu_custom_call.1} parent=1 // pred_check_branch
      %62 = sbr.rel (0) target = $region21
    $region20: #{tpu_custom_call.1} parent=1 // pred_region
      _
    $region21: #{tpu_custom_call.1} parent=1 // pred_fallthru
      _
    // Predicated region
    $region22: #{tpu_custom_call.1} parent=1 // pred_check
      _
    $region23: #{tpu_custom_call.1} parent=1 // pred_check_branch
      %64 = sbr.rel (0) target = $region25
    $region24: #{tpu_custom_call.1} parent=1 // pred_region
      _
    $region25: #{tpu_custom_call.1} parent=1 // pred_fallthru
      _
    // Predicated region
    $region26: #{tpu_custom_call.1} parent=1 // pred_check
      _
    $region27: #{tpu_custom_call.1} parent=1 // pred_check_branch
      %66 = sbr.rel (0) target = $region29
    $region28: #{tpu_custom_call.1} parent=1 // pred_region
      _
    $region29: #{tpu_custom_call.1} parent=1 // pred_fallthru
      _
    // Predicated region
    $region30: #{tpu_custom_call.1} parent=1 // pred_check
      _
    $region31: #{tpu_custom_call.1} parent=1 // pred_check_branch
      %68 = sbr.rel (0) target = $region33
    $region32: #{tpu_custom_call.1} parent=1 // pred_region
      _
    $region33: #{tpu_custom_call.1} parent=1 // pred_fallthru
      _
    // Predicated region
    $region34: #{tpu_custom_call.1} parent=1 // pred_check
      _
    $region35: #{tpu_custom_call.1} parent=1 // pred_check_branch
      %70 = sbr.rel (0) target = $region37
    $region36: #{tpu_custom_call.1} parent=1 // pred_region
      _
    $region37: #{tpu_custom_call.1} parent=1 // pred_fallthru
      _
    // Predicated region
    $region38: #{tpu_custom_call.1} parent=1 // pred_check
      _
    $region39: #{tpu_custom_call.1} parent=1 // pred_check_branch
      %72 = sbr.rel (0) target = $region41
    $region40: #{tpu_custom_call.1} parent=1 // pred_region
      _
    $region41: #{tpu_custom_call.1} parent=1 // pred_fallthru
      _
    // Predicated region
    $region42: #{tpu_custom_call.1} parent=1 // pred_check
      _
    $region43: #{tpu_custom_call.1} parent=1 // pred_check_branch
      %74 = sbr.rel (0) target = $region45
    $region44: #{tpu_custom_call.1} parent=1 // pred_region
      _
    $region45: #{tpu_custom_call.1} parent=1 // pred_fallthru
      _
    // Predicated region
    $region46: #{tpu_custom_call.1} parent=1 // pred_check
      _
    $region47: #{tpu_custom_call.1} parent=1 // pred_check_branch
      %76 = sbr.rel (0) target = $region49
    $region48: #{tpu_custom_call.1} parent=1 // pred_region
      _
    $region49: #{tpu_custom_call.1} parent=1 // pred_fallthru
      _
    // Predicated region
    $region50: #{tpu_custom_call.1} parent=1 // pred_check
      _
    $region51: #{tpu_custom_call.1} parent=1 // pred_check_branch
      %78 = sbr.rel (0) target = $region53
    $region52: #{tpu_custom_call.1} parent=1 // pred_region
      _
    $region53: #{tpu_custom_call.1} parent=1 // pred_fallthru
      _
    // Predicated region
    $region54: #{tpu_custom_call.1} parent=1 // pred_check
      _
    $region55: #{tpu_custom_call.1} parent=1 // pred_check_branch
      %80 = sbr.rel (0) target = $region57
    $region56: #{tpu_custom_call.1} parent=1 // pred_region
      _
    $region57: #{tpu_custom_call.1} parent=1 // pred_fallthru
      _
    // Predicated region
    $region58: #{tpu_custom_call.1} parent=1 // pred_check
      _
    $region59: #{tpu_custom_call.1} parent=1 // pred_check_branch
      %82 = sbr.rel (0) target = $region61
    $region60: #{tpu_custom_call.1} parent=1 // pred_region
      _
    $region61: #{tpu_custom_call.1} parent=1 // pred_fallthru
      _
    // Predicated region
    $region62: #{tpu_custom_call.1} parent=1 // pred_check
      _
    $region63: #{tpu_custom_call.1} parent=1 // pred_check_branch
      %84 = sbr.rel (0) target = $region65
    $region64: #{tpu_custom_call.1} parent=1 // pred_region
      _
    $region65: #{tpu_custom_call.1} parent=1 // pred_fallthru
      _
    // Predicated region
    $region66: #{tpu_custom_call.1} parent=1 // pred_check
      _
    $region67: #{tpu_custom_call.1} parent=1 // pred_check_branch
      %86 = sbr.rel (0) target = $region69
    $region68: #{tpu_custom_call.1} parent=1 // pred_region
      _
    $region69: #{tpu_custom_call.1} parent=1 // pred_fallthru
      _
    // Predicated region
    $region70: #{tpu_custom_call.1} parent=1 // pred_check
      _
    $region71: #{tpu_custom_call.1} parent=1 // pred_check_branch
      %88 = sbr.rel (0) target = $region73
    $region72: #{tpu_custom_call.1} parent=1 // pred_region
      %90 = dma.done [#allocation4], 64
    $region73: #{tpu_custom_call.1} parent=1 // pred_fallthru
      _
    // Predicated region
    $region74: #{tpu_custom_call.1} parent=1 // pred_check
      _
    $region75: #{tpu_custom_call.1} parent=1 // pred_check_branch
      %92 = sbr.rel (0) target = $region77
    $region76: #{tpu_custom_call.1} parent=1 // pred_region
      %94 = dma.done [#allocation6], 64
    $region77: #{tpu_custom_call.1} parent=1 // pred_fallthru
      _
    // Predicated region
    $region78: #{tpu_custom_call.1} parent=1 // pred_check
      _
    $region79: #{tpu_custom_call.1} parent=1 // pred_check_branch
      %96 = sbr.rel (0) target = $region81
    $region80: #{tpu_custom_call.1} parent=1 // pred_region
      %98 = dma.done [#allocation6], 64
    $region81: #{tpu_custom_call.1} parent=1 // pred_fallthru
      _
    %v100 = vld [vmem:[#allocation3] sm:$0xf]
    %v101 = vpack.c.bf16 %v100, %v100
    %v102 = vld [vmem:[%s3] sm:$0xf]
    %v103 = vld [vmem:[%s3 + $0x4] sm:$0xf]
    %v104 = vld [vmem:[%s3 + $0x8] sm:$0xf]
    %v105 = vld [vmem:[%s3 + $0xc] sm:$0xf]
    %v106 = vld [vmem:[%s3 + $0x10] sm:$0xf]
    %v107 = vld [vmem:[%s3 + $0x14] sm:$0xf]
    %v108 = vld [vmem:[%s3 + $0x18] sm:$0xf]
    %v109 = vld [vmem:[%s3 + $0x1c] sm:$0xf]
    %v110 = vld [vmem:[%s4] sm:$0x1]
    %v112 = vperm.slane %v110, 0
    %v122 = vunpack.c.l.b16 %v102
    %v123 = vunpack.c.l.b16 %v103
    %v124 = vunpack.c.l.b16 %v104
    %v125 = vunpack.c.l.b16 %v105
    %v126 = vunpack.c.l.b16 %v106
    %v127 = vunpack.c.l.b16 %v107
    %v128 = vunpack.c.l.b16 %v108
    %v129 = vunpack.c.l.b16 %v109
    %v130 = vpack.c.b16 %v123, %v122
    %v131 = vpack.c.b16 %v125, %v124
    %v132 = vpack.c.b16 %v127, %v126
    %v133 = vpack.c.b16 %v129, %v128
    %vm138 = vcmask 523264
    %v140 = vsel %vm138, %v101, 0
    %142 = vmatpush.bf16.msra.mxu0 0
    %143 = vmatpush.bf16.msra.mxu0 0
    %144 = vmatpush.bf16.msra.mxu0 0
    %145 = vmatpush.bf16.msra.mxu0 0
    %146 = vmatpush.bf16.msra.mxu0 %v133
    %147 = vmatpush.bf16.msra.mxu0 %v132
    %148 = vmatpush.bf16.msra.mxu0 %v131
    %149 = vmatpush.bf16.msra.mxu0 %v130
    %150 = vmatmul.bf16.gmra.mxu0 %v140
    %v151 = vpop.f32.mrf.mxu0
    %v152 = vadd.f32 %v112, %v151
    %v153 = vpop.f32.mrf.mxu0
    %154 = vdwg.mxu0
    %v155 = vmax.f32 %v152, 0.0
    %v156 = vld [vmem:[#allocation5] sm:$0xf]
    %v157 = vpack.c.bf16 %v156, %v156
    %v158 = vld [vmem:[%s5] sm:$0xf]
    %v159 = vld [vmem:[%s5 + $0x4] sm:$0xf]
    %v160 = vld [vmem:[%s5 + $0x8] sm:$0xf]
    %v161 = vld [vmem:[%s5 + $0xc] sm:$0xf]
    %v162 = vld [vmem:[%s5 + $0x10] sm:$0xf]
    %v163 = vld [vmem:[%s5 + $0x14] sm:$0xf]
    %v164 = vld [vmem:[%s5 + $0x18] sm:$0xf]
    %v165 = vld [vmem:[%s5 + $0x1c] sm:$0xf]
    %v166 = vld [vmem:[%s5 + $0x20] sm:$0xf]
    %v167 = vld [vmem:[%s5 + $0x24] sm:$0xf]
    %v168 = vld [vmem:[%s5 + $0x28] sm:$0xf]
    %v169 = vld [vmem:[%s5 + $0x2c] sm:$0xf]
    %v170 = vld [vmem:[%s6] sm:$0x1]
    %v172 = vperm.slane %v170, 0
    %v186 = vunpack.c.l.b16 %v158
    %v187 = vunpack.c.l.b16 %v159
    %v188 = vunpack.c.l.b16 %v160
    %v189 = vunpack.c.l.b16 %v161
    %v190 = vunpack.c.l.b16 %v162
    %v191 = vunpack.c.l.b16 %v163
    %v192 = vunpack.c.l.b16 %v164
    %v193 = vunpack.c.l.b16 %v165
    %v194 = vunpack.c.l.b16 %v166
    %v195 = vunpack.c.l.b16 %v167
    %v196 = vunpack.c.l.b16 %v168
    %v197 = vunpack.c.l.b16 %v169
    %v198 = vpack.c.b16 %v187, %v186
    %v199 = vpack.c.b16 %v189, %v188
    %v200 = vpack.c.b16 %v191, %v190
    %v201 = vpack.c.b16 %v193, %v192
    %v202 = vpack.c.b16 %v195, %v194
    %v203 = vpack.c.b16 %v197, %v196
    %vm210 = vcmask 785408
    %v212 = vsel %vm210, %v157, 0
    %214 = vmatpush.bf16.msra.mxu0 0
    %215 = vmatpush.bf16.msra.mxu0 0
    %216 = vmatpush.bf16.msra.mxu0 %v203
    %217 = vmatpush.bf16.msra.mxu0 %v202
    %218 = vmatpush.bf16.msra.mxu0 %v201
    %219 = vmatpush.bf16.msra.mxu0 %v200
    %220 = vmatpush.bf16.msra.mxu0 %v199
    %221 = vmatpush.bf16.msra.mxu0 %v198
    %222 = vmatmul.bf16.gmra.mxu0 %v212
    %v223 = vpop.f32.mrf.mxu0
    %v224 = vadd.f32 %v172, %v223
    %v225 = vpop.f32.mrf.mxu0
    %226 = vdwg.mxu0
    %v227 = vmax.f32 %v224, 0.0
    %v228 = vld [vmem:[#allocation7] sm:$0xf]
    %v229 = vpack.c.bf16 %v228, %v228
    %v230 = vld [vmem:[%s7] sm:$0xf]
    %v231 = vld [vmem:[%s7 + $0x4] sm:$0xf]
    %v232 = vld [vmem:[%s7 + $0x8] sm:$0xf]
    %v233 = vld [vmem:[%s7 + $0xc] sm:$0xf]
    %v234 = vld [vmem:[%s7 + $0x10] sm:$0xf]
    %v235 = vld [vmem:[%s7 + $0x14] sm:$0xf]
    %v236 = vld [vmem:[%s7 + $0x18] sm:$0xf]
    %v237 = vld [vmem:[%s7 + $0x1c] sm:$0xf]
    %v238 = vld [vmem:[%s8] sm:$0x1]
    %v240 = vperm.slane %v238, 0
    %v250 = vunpack.c.l.b16 %v230
    %v251 = vunpack.c.l.b16 %v231
    %v252 = vunpack.c.l.b16 %v232
    %v253 = vunpack.c.l.b16 %v233
    %v254 = vunpack.c.l.b16 %v234
    %v255 = vunpack.c.l.b16 %v235
    %v256 = vunpack.c.l.b16 %v236
    %v257 = vunpack.c.l.b16 %v237
    %v258 = vpack.c.b16 %v251, %v250
    %v259 = vpack.c.b16 %v253, %v252
    %v260 = vpack.c.b16 %v255, %v254
    %v261 = vpack.c.b16 %v257, %v256
    %v267 = vsel %vm138, %v229, 0
    %269 = vmatpush.bf16.msra.mxu0 0
    %270 = vmatpush.bf16.msra.mxu0 0
    %271 = vmatpush.bf16.msra.mxu0 0
    %272 = vmatpush.bf16.msra.mxu0 0
    %273 = vmatpush.bf16.msra.mxu0 %v261
    %274 = vmatpush.bf16.msra.mxu0 %v260
    %275 = vmatpush.bf16.msra.mxu0 %v259
    %276 = vmatpush.bf16.msra.mxu0 %v258
    %277 = vmatmul.bf16.gmra.mxu0 %v267
    %v278 = vpop.f32.mrf.mxu0
    %v279 = vadd.f32 %v240, %v278
    %v280 = vpop.f32.mrf.mxu0
    %281 = vdwg.mxu0
    %v282 = vmax.f32 %v279, 0.0
    %v283 = vpack.c.bf16 %v155, %v155
    %v284 = vld [vmem:[%s9] sm:$0xf]
    %v285 = vld [vmem:[%s9 + $0x4] sm:$0xf]
    %v286 = vld [vmem:[%s9 + $0x8] sm:$0xf]
    %v287 = vld [vmem:[%s9 + $0xc] sm:$0xf]
    %v288 = vpack.c.bf16 %v282, %v282
    %v289 = vld [vmem:[%s10] sm:$0xf]
    %v290 = vld [vmem:[%s10 + $0x4] sm:$0xf]
    %v291 = vld [vmem:[%s10 + $0x8] sm:$0xf]
    %v292 = vld [vmem:[%s10 + $0xc] sm:$0xf]
    %v297 = vunpack.c.l.b16 %v289
    %v298 = vunpack.c.l.b16 %v290
    %v299 = vunpack.c.l.b16 %v291
    %v300 = vunpack.c.l.b16 %v292
    %v301 = vpack.c.b16 %v298, %v297
    %v302 = vpack.c.b16 %v300, %v299
    %vm305 = vcmask 261120
    %v307 = vsel %vm305, %v288, 0
    %309 = vmatpush.bf16.msra.mxu0 0
    %310 = vmatpush.bf16.msra.mxu0 0
    %311 = vmatpush.bf16.msra.mxu0 0
    %312 = vmatpush.bf16.msra.mxu0 0
    %313 = vmatpush.bf16.msra.mxu0 0
    %314 = vmatpush.bf16.msra.mxu0 0
    %315 = vmatpush.bf16.msra.mxu0 %v302
    %316 = vmatpush.bf16.msra.mxu0 %v301
    %317 = vmatmul.bf16.gmra.mxu0 %v307
    %v318 = vpop.f32.mrf.mxu0
    %v319 = vadd.f32 0.0, %v318
    %v320 = vpop.f32.mrf.mxu0
    %321 = vdwg.mxu0
    %v326 = vunpack.c.l.b16 %v284
    %v327 = vunpack.c.l.b16 %v285
    %v328 = vunpack.c.l.b16 %v286
    %v329 = vunpack.c.l.b16 %v287
    %v330 = vpack.c.b16 %v327, %v326
    %v331 = vpack.c.b16 %v329, %v328
    %v335 = vsel %vm305, %v283, 0
    %337 = vmatpush.bf16.msra.mxu0 0
    %338 = vmatpush.bf16.msra.mxu0 0
    %339 = vmatpush.bf16.msra.mxu0 0
    %340 = vmatpush.bf16.msra.mxu0 0
    %341 = vmatpush.bf16.msra.mxu0 0
    %342 = vmatpush.bf16.msra.mxu0 0
    %343 = vmatpush.bf16.msra.mxu0 %v331
    %344 = vmatpush.bf16.msra.mxu0 %v330
    %345 = vmatmul.bf16.gmra.mxu0 %v335
    %v346 = vpop.f32.mrf.mxu0
    %v347 = vadd.f32 %v319, %v346
    %v348 = vpop.f32.mrf.mxu0
    %349 = vdwg.mxu0
    %v350 = vpack.c.bf16 %v227, %v227
    %v351 = vld [vmem:[%s11] sm:$0xf]
    %v352 = vld [vmem:[%s11 + $0x4] sm:$0xf]
    %v353 = vld [vmem:[%s11 + $0x8] sm:$0xf]
    %v354 = vld [vmem:[%s11 + $0xc] sm:$0xf]
    %v355 = vld [vmem:[%s11 + $0x10] sm:$0xf]
    %v356 = vld [vmem:[%s11 + $0x14] sm:$0xf]
    %v357 = vld [vmem:[%s11 + $0x18] sm:$0xf]
    %v358 = vld [vmem:[%s11 + $0x1c] sm:$0xf]
    %v367 = vunpack.c.l.b16 %v351
    %v368 = vunpack.c.l.b16 %v352
    %v369 = vunpack.c.l.b16 %v353
    %v370 = vunpack.c.l.b16 %v354
    %v371 = vunpack.c.l.b16 %v355
    %v372 = vunpack.c.l.b16 %v356
    %v373 = vunpack.c.l.b16 %v357
    %v374 = vunpack.c.l.b16 %v358
    %v375 = vpack.c.b16 %v368, %v367
    %v376 = vpack.c.b16 %v370, %v369
    %v377 = vpack.c.b16 %v372, %v371
    %v378 = vpack.c.b16 %v374, %v373
    %v384 = vsel %vm138, %v350, 0
    %386 = vmatpush.bf16.msra.mxu0 0
    %387 = vmatpush.bf16.msra.mxu0 0
    %388 = vmatpush.bf16.msra.mxu0 0
    %389 = vmatpush.bf16.msra.mxu0 0
    %390 = vmatpush.bf16.msra.mxu0 %v378
    %391 = vmatpush.bf16.msra.mxu0 %v377
    %392 = vmatpush.bf16.msra.mxu0 %v376
    %393 = vmatpush.bf16.msra.mxu0 %v375
    %394 = vmatmul.bf16.gmra.mxu0 %v384
    %v395 = vpop.f32.mrf.mxu0
    %v396 = vadd.f32 0.0, %v395
    %v397 = vpop.f32.mrf.mxu0
    %398 = vdwg.mxu0
    %v399 = vadd.f32 %v347, %v396
    %v400 = vld [vmem:[%s12] sm:$0x1]
    %v402 = vperm.slane %v400, 0
    %v404 = vadd.f32 %v399, %v402
    %v405 = vmax.f32 %v404, 0.0
    %v406 = vpack.c.bf16 %v405, %v405
    %v407 = vld [vmem:[%s13] sm:$0xf]
    %v408 = vld [vmem:[%s13 + $0x4] sm:$0xf]
    %v409 = vld [vmem:[%s13 + $0x8] sm:$0xf]
    %v410 = vld [vmem:[%s13 + $0xc] sm:$0xf]
    %v411 = vld [vmem:[%s13 + $0x10] sm:$0xf]
    %v412 = vld [vmem:[%s13 + $0x14] sm:$0xf]
    %v413 = vld [vmem:[%s13 + $0x18] sm:$0xf]
    %v414 = vld [vmem:[%s13 + $0x1c] sm:$0xf]
    %v415 = vld [vmem:[%s13 + $0x20] sm:$0xf]
    %v416 = vld [vmem:[%s13 + $0x24] sm:$0xf]
    %v417 = vld [vmem:[%s13 + $0x28] sm:$0xf]
    %v418 = vld [vmem:[%s13 + $0x2c] sm:$0xf]
    %v419 = vld [vmem:[%s13 + $0x30] sm:$0xf]
    %v420 = vld [vmem:[%s13 + $0x34] sm:$0xf]
    %v421 = vld [vmem:[%s13 + $0x38] sm:$0xf]
    %v422 = vld [vmem:[%s13 + $0x3c] sm:$0xf]
    %v423 = vld [vmem:[%s14] sm:$0x1]
    %v425 = vperm.slane %v423, 0
    %v443 = vunpack.c.l.b16 %v407
    %v444 = vunpack.c.l.b16 %v408
    %v445 = vunpack.c.l.b16 %v409
    %v446 = vunpack.c.l.b16 %v410
    %v447 = vunpack.c.l.b16 %v411
    %v448 = vunpack.c.l.b16 %v412
    %v449 = vunpack.c.l.b16 %v413
    %v450 = vunpack.c.l.b16 %v414
    %v451 = vunpack.c.l.b16 %v415
    %v452 = vunpack.c.l.b16 %v416
    %v453 = vunpack.c.l.b16 %v417
    %v454 = vunpack.c.l.b16 %v418
    %v455 = vunpack.c.l.b16 %v419
    %v456 = vunpack.c.l.b16 %v420
    %v457 = vunpack.c.l.b16 %v421
    %v458 = vunpack.c.l.b16 %v422
    %v459 = vpack.c.b16 %v444, %v443
    %v460 = vpack.c.b16 %v446, %v445
    %v461 = vpack.c.b16 %v448, %v447
    %v462 = vpack.c.b16 %v450, %v449
    %v463 = vpack.c.b16 %v452, %v451
    %v464 = vpack.c.b16 %v454, %v453
    %v465 = vpack.c.b16 %v456, %v455
    %v466 = vpack.c.b16 %v458, %v457
    %475 = vmatpush.bf16.msra.mxu0 %v466
    %476 = vmatpush.bf16.msra.mxu0 %v465
    %477 = vmatpush.bf16.msra.mxu0 %v464
    %478 = vmatpush.bf16.msra.mxu0 %v463
    %479 = vmatpush.bf16.msra.mxu0 %v462
    %480 = vmatpush.bf16.msra.mxu0 %v461
    %481 = vmatpush.bf16.msra.mxu0 %v460
    %482 = vmatpush.bf16.msra.mxu0 %v459
    %483 = vmatmul.bf16.gmra.mxu0 %v406
    %v484 = vpop.f32.mrf.mxu0
    %v485 = vadd.f32 %v425, %v484
    %v486 = vpop.f32.mrf.mxu0
    %487 = vdwg.mxu0
    %v488 = vmax.f32 %v485, 0.0
    %v489 = vld [vmem:[%s15] sm:$0x1]
    %v491 = vperm.slane %v489, 0
    %v493 = vmul.f32 %v488, %v491
    %vm494 = vcmask 1043456
    %v495 = vsel %vm494, %v493, 0.0
    %496 = vadd.xlane.f32.xlu0 %v495
    %v497 = vpop.xlane.xlu0 %496
    %v498 = vld [vmem:[#allocation2] sm:$0x1]
    %v500 = vperm.slane %v498, 0
    %v502 = vadd.f32 %v497, %v500
    %vm503 = vcmask 3072
    %504 = vst.msk [vmem:[%s17] sm:$0xf] %vm503, %v502
    // Predicated region
    $region82: #{tpu_custom_call.1} parent=1 // pred_check
      _
    $region83: #{tpu_custom_call.1} parent=1 // pred_check_branch
      %506 = sbr.rel (0) target = $region85
    $region84: #{tpu_custom_call.1} parent=1 // pred_region
      _
    $region85: #{tpu_custom_call.1} parent=1 // pred_fallthru
      _
    // Predicated region
    $region86: #{tpu_custom_call.1} parent=1 // pred_check
      _
    $region87: #{tpu_custom_call.1} parent=1 // pred_check_branch
      %508 = sbr.rel (0) target = $region89
    $region88: #{tpu_custom_call.1} parent=1 // pred_region
      _
    $region89: #{tpu_custom_call.1} parent=1 // pred_fallthru
      _
    %509 = vsyncpa [#allocation4], 1
    %510 = vsyncpa [#allocation6], 1

</llo_original>
